<compile_context>
chip_gen: v6e
topology: v6e:2x2x1
jax: 0.10.0
libtpu: 0.0.40
codegen_flags: <defaults>
</compile_context>

<pallas_src>
import jax
import jax.numpy as jnp
from jax.experimental import pallas as pl
from jax.experimental.pallas import tpu as pltpu

P_DROP = 0.1          # nn.Dropout(0.1)
DIV_SCALE = 0.1       # v2 = v1.div(0.1)
INV_DIV = 1.0 / DIV_SCALE


def _sdp_dropout_kernel(q_ref, k_ref, v_ref, u_ref, o_ref):
    # Blocks are (1, ...) slabs of one head; index [0] to get the 2-D views.
    q = q_ref[0] * INV_DIV                       # [M, D]  (scale on small operand)
    k = k_ref[0]                                 # [N, D]
    v = v_ref[0]                                 # [N, Dv]

    # s = (x1 / 0.1) @ x2^T, contracting the lane axis of both (no transpose).
    s = jax.lax.dot_general(
        q, k,
        dimension_numbers=(((1,), (1,)), ((), ())),
        preferred_element_type=jnp.float32,
    )                                            # [M, N] f32

    # softmax(s, -1) with the dropout rescale 1/(1-p) folded into the
    # (approximate, EUP) reciprocal of the denominator.
    m = jnp.max(s, axis=-1, keepdims=True)
    e = jnp.exp(s - m)
    denom = jnp.sum(e, axis=-1, keepdims=True)
    inv = pl.reciprocal(denom * (1.0 - P_DROP), approx=True)
    p = e * inv                                  # softmax / (1 - p)

    # Dropout: keep with probability 1-p, applied as a single select.
    # TODO(synk): RNG stream differs from torch's dropout; keep-prob and
    # 1/(1-p) rescale semantics are identical.
    keep = u_ref[0] >= P_DROP                    # P(keep) = 0.9
    p = jnp.where(keep, p, 0.0)

    # v5 = dropout(softmax) @ x3, probs cast to v's dtype for the MXU.
    out = jnp.dot(p.astype(v.dtype), v, preferred_element_type=jnp.float32)
    o_ref[0] = out.astype(o_ref.dtype)


def model_forward(x1, x2, x3, x4, key=None):
    """Pallas implementation of Model.forward. x4 is unused (matches torch)."""
    del x4
    squeeze = x1.ndim == 2
    if squeeze:                                  # plain 2-D case of the module
        x1, x2, x3 = x1[None], x2[None], x3[None]

    B, M, D = x1.shape
    _, N, D2 = x2.shape
    assert D == D2, "contraction dims must match"
    _, N2, Dv = x3.shape
    assert N2 == N

    if key is None:
        key = jax.random.PRNGKey(0)
    # Uniform draws for the dropout mask (consumed with a >= compare in-kernel).
    u = jax.random.uniform(key, (B, M, N), dtype=jnp.float32)

    out = pl.pallas_call(
        _sdp_dropout_kernel,
        out_shape=jax.ShapeDtypeStruct((B, M, Dv), x1.dtype),
        grid=(B,),
        in_specs=[
            pl.BlockSpec((1, M, D), lambda b: (b, 0, 0)),    # x1 (query)
            pl.BlockSpec((1, N, D), lambda b: (b, 0, 0)),    # x2 (key)
            pl.BlockSpec((1, N, Dv), lambda b: (b, 0, 0)),   # x3 (value)
            pl.BlockSpec((1, M, N), lambda b: (b, 0, 0)),    # dropout uniforms
        ],
        out_specs=pl.BlockSpec((1, M, Dv), lambda b: (b, 0, 0)),
        compiler_params=pltpu.CompilerParams(
            dimension_semantics=("parallel",)),
    )(x1, x2, x3, u)

    return out[0] if squeeze else out


def _reference(x1, x2, x3, u):
    """Pure-JAX reference using the same dropout mask."""
    s = jnp.einsum("bmd,bnd->bmn", x1, x2,
                   preferred_element_type=jnp.float32) / DIV_SCALE
    p = jax.nn.softmax(s, axis=-1)
    p = jnp.where(u >= P_DROP, p / (1.0 - P_DROP), 0.0)
    return jnp.einsum("bmn,bnv->bmv", p.astype(x3.dtype), x3,
                      preferred_element_type=jnp.float32).astype(x1.dtype)


if __name__ == "__main__":
    key = jax.random.PRNGKey(0)
    k1, k2, k3, k4, kdrop = jax.random.split(key, 5)

    # Small but lane-dense shapes: 2 heads, M=8 query rows (1 sublane tile),
    # N = D = Dv = 128 so every vreg / store uses the full 128-lane axis.
    B, M, N, D, Dv = 2, 8, 128, 128, 128
    x1 = jax.random.normal(k1, (B, M, D), dtype=jnp.float32)
    x2 = jax.random.normal(k2, (B, N, D), dtype=jnp.float32)
    x3 = jax.random.normal(k3, (B, N, Dv), dtype=jnp.float32)
    x4 = jax.random.normal(k4, (B, M, N), dtype=jnp.float32)   # unused by forward

    out = model_forward(x1, x2, x3, x4, key=kdrop)
    out = jax.block_until_ready(out)
    assert out.shape == (B, M, Dv), out.shape

    # Same dropout uniforms as inside the wrapper (same key/shape/dtype).
    u = jax.random.uniform(kdrop, (B, M, N), dtype=jnp.float32)
    ref = jax.block_until_ready(_reference(x1, x2, x3, u))
    assert bool(jnp.all(jnp.isfinite(out)))
    assert bool(jnp.allclose(out, ref, rtol=2e-2, atol=2e-2)), "mismatch vs reference"

    print("KERNEL_OK")
</pallas_src>

<mosaic_0001>
module attributes {stable_mosaic.version = 11 : i64} {
  func.func @_sdp_dropout_kernel(%arg0: i32, %arg1: memref<1x8x128xf32, #tpu.memory_space<vmem>>, %arg2: memref<1x128x128xf32, #tpu.memory_space<vmem>>, %arg3: memref<1x128x128xf32, #tpu.memory_space<vmem>>, %arg4: memref<1x8x128xf32, #tpu.memory_space<vmem>>, %arg5: memref<1x8x128xf32, #tpu.memory_space<vmem>>) attributes {dimension_semantics = [#tpu.dimension_semantics<parallel>], iteration_bounds = array<i64: 2>, scalar_prefetch = 0 : i64, scratch_operands = 0 : i64, tpu.core_type = #tpu.core_type<tc>, window_params = [{transform_indices = @transform_0, window_bounds = array<i64: 1, 8, 128>}, {transform_indices = @transform_1, window_bounds = array<i64: 1, 128, 128>}, {transform_indices = @transform_2, window_bounds = array<i64: 1, 128, 128>}, {transform_indices = @transform_3, window_bounds = array<i64: 1, 8, 128>}, {transform_indices = @transform_4, window_bounds = array<i64: 1, 8, 128>}]} {
    %c0 = arith.constant 0 : index
    %c0_0 = arith.constant 0 : index
    %c0_1 = arith.constant 0 : index
    %0 = vector.load %arg1[%c0, %c0_0, %c0_1] : memref<1x8x128xf32, #tpu.memory_space<vmem>>, vector<1x8x128xf32>
    %1 = vector.shape_cast %0 : vector<1x8x128xf32> to vector<8x128xf32>
    %cst = arith.constant 1.000000e+01 : f32
    %2 = vector.broadcast %cst : f32 to vector<8x128xf32>
    %3 = arith.mulf %1, %2 : vector<8x128xf32>
    %c0_2 = arith.constant 0 : index
    %c0_3 = arith.constant 0 : index
    %c0_4 = arith.constant 0 : index
    %4 = vector.load %arg2[%c0_2, %c0_3, %c0_4] : memref<1x128x128xf32, #tpu.memory_space<vmem>>, vector<1x128x128xf32>
    %5 = vector.shape_cast %4 : vector<1x128x128xf32> to vector<128x128xf32>
    %c0_5 = arith.constant 0 : index
    %c0_6 = arith.constant 0 : index
    %c0_7 = arith.constant 0 : index
    %6 = vector.load %arg3[%c0_5, %c0_6, %c0_7] : memref<1x128x128xf32, #tpu.memory_space<vmem>>, vector<1x128x128xf32>
    %7 = vector.shape_cast %6 : vector<1x128x128xf32> to vector<128x128xf32>
    %cst_8 = arith.constant dense<0.000000e+00> : vector<8x128xf32>
    %8 = tpu.matmul %3, %5, %cst_8 {dimension_numbers = #tpu.dot_dimension_numbers<[1], [1], [0], [0], [0, 0, 1, 0], [], []>} : vector<8x128xf32>, vector<128x128xf32>, vector<8x128xf32> -> vector<8x128xf32>
    %cst_9 = arith.constant dense<0xFF800000> : vector<8xf32>
    %9 = vector.multi_reduction <maximumf>, %8, %cst_9 [1] : vector<8x128xf32> to vector<8xf32>
    %10 = vector.shape_cast %9 : vector<8xf32> to vector<8x1xf32>
    %11 = vector.broadcast %10 : vector<8x1xf32> to vector<8x128xf32>
    %12 = arith.subf %8, %11 : vector<8x128xf32>
    %13 = math.exp %12 : vector<8x128xf32>
    %cst_10 = arith.constant dense<0.000000e+00> : vector<8xf32>
    %14 = vector.multi_reduction <add>, %13, %cst_10 [1] : vector<8x128xf32> to vector<8xf32>
    %15 = vector.shape_cast %14 : vector<8xf32> to vector<8x1xf32>
    %cst_11 = arith.constant 0.899999976 : f32
    %16 = vector.broadcast %cst_11 : f32 to vector<8x1xf32>
    %17 = arith.mulf %15, %16 : vector<8x1xf32>
    %18 = tpu.reciprocal %17 {approx = true} : vector<8x1xf32> -> vector<8x1xf32>
    %19 = vector.broadcast %18 : vector<8x1xf32> to vector<8x128xf32>
    %20 = arith.mulf %13, %19 : vector<8x128xf32>
    %c0_12 = arith.constant 0 : index
    %c0_13 = arith.constant 0 : index
    %c0_14 = arith.constant 0 : index
    %21 = vector.load %arg4[%c0_12, %c0_13, %c0_14] : memref<1x8x128xf32, #tpu.memory_space<vmem>>, vector<1x8x128xf32>
    %22 = vector.shape_cast %21 : vector<1x8x128xf32> to vector<8x128xf32>
    %cst_15 = arith.constant 1.000000e-01 : f32
    %23 = vector.broadcast %cst_15 : f32 to vector<8x128xf32>
    %24 = arith.cmpf oge, %22, %23 : vector<8x128xf32>
    %cst_16 = arith.constant 0.000000e+00 : f32
    %25 = vector.broadcast %cst_16 : f32 to vector<8x128xf32>
    %26 = arith.select %24, %20, %25 : vector<8x128xi1>, vector<8x128xf32>
    %cst_17 = arith.constant dense<0.000000e+00> : vector<8x128xf32>
    %27 = tpu.matmul %26, %7, %cst_17 {dimension_numbers = #tpu.dot_dimension_numbers<[1], [0], [0], [1], [0, 0, 1, 1], [], []>} : vector<8x128xf32>, vector<128x128xf32>, vector<8x128xf32> -> vector<8x128xf32>
    %c0_18 = arith.constant 0 : index
    %c0_19 = arith.constant 0 : index
    %c0_20 = arith.constant 0 : index
    %28 = vector.load %arg5[%c0_18, %c0_19, %c0_20] : memref<1x8x128xf32, #tpu.memory_space<vmem>>, vector<1x8x128xf32>
    %29 = vector.shape_cast %28 : vector<1x8x128xf32> to vector<8x128xf32>
    %30 = vector.shape_cast %27 : vector<8x128xf32> to vector<1x8x128xf32>
    tpu.vector_store %arg5[%c0_18, %c0_19, %c0_20], %30 {strides = array<i32>} : memref<1x8x128xf32, #tpu.memory_space<vmem>>, vector<1x8x128xf32>,
    return
  }
  func.func @transform_0(%arg0: i32) -> (i32, i32, i32) {
    %c0_i32 = arith.constant 0 : i32
    %c0_i32_0 = arith.constant 0 : i32
    %c0_i32_1 = arith.constant 0 : i32
    return %arg0, %c0_i32, %c0_i32_0 : i32, i32, i32
  }
  func.func @transform_1(%arg0: i32) -> (i32, i32, i32) {
    %c0_i32 = arith.constant 0 : i32
    %c0_i32_0 = arith.constant 0 : i32
    %c0_i32_1 = arith.constant 0 : i32
    return %arg0, %c0_i32, %c0_i32_0 : i32, i32, i32
  }
  func.func @transform_2(%arg0: i32) -> (i32, i32, i32) {
    %c0_i32 = arith.constant 0 : i32
    %c0_i32_0 = arith.constant 0 : i32
    %c0_i32_1 = arith.constant 0 : i32
    return %arg0, %c0_i32, %c0_i32_0 : i32, i32, i32
  }
  func.func @transform_3(%arg0: i32) -> (i32, i32, i32) {
    %c0_i32 = arith.constant 0 : i32
    %c0_i32_0 = arith.constant 0 : i32
    %c0_i32_1 = arith.constant 0 : i32
    return %arg0, %c0_i32, %c0_i32_0 : i32, i32, i32
  }
  func.func @transform_4(%arg0: i32) -> (i32, i32, i32) {
    %c0_i32 = arith.constant 0 : i32
    %c0_i32_0 = arith.constant 0 : i32
    %c0_i32_1 = arith.constant 0 : i32
    return %arg0, %c0_i32, %c0_i32_0 : i32, i32, i32
  }
}

</mosaic_0001>

<llo_original>
// kernel: tpu_custom_call.1
$region0: #{tpu_custom_call.1}
  #allocation0 [shape = 'u32[]', space=smem, size = 0x4, offset = 0x4, fixed_abs, tag = 'smem constant byte address 0x4 - core index']
  #allocation1 [shape = 'u32[144,128]{1,0:T(1,128)}', space=vmem, size = 0x12000, scoped, tag = 'internal scratch']
  %s0 = inlined_call_operand.hbm [shape: f32[2,8,128], index: 0, kind: input, shape index: {}]
  %s1 = inlined_call_operand.hbm [shape: f32[2,128,128], index: 1, kind: input, shape index: {}]
  %s2 = inlined_call_operand.hbm [shape: f32[2,128,128], index: 2, kind: input, shape index: {}]
  %s3 = inlined_call_operand.hbm [shape: f32[2,8,128], index: 3, kind: input, shape index: {}]
  %s4 = inlined_call_operand.hbm [shape: f32[2,8,128], index: 4, kind: output, shape index: {}]
  %s5 = sld [smem:[#allocation0]]
  $region65: #{tpu_custom_call.1} parent=0
    _
  %s7 = ssub.s32 1, %s5
  %s8 = scalar_select 0, %s7, %s5
  $region1: #{tpu_custom_call.1} parent=0
    #allocation2 [shape = 'u8[8192]{0}', space=vmem, size = 0x2000, scoped, tag = 'input window, operand 0']
    #allocation3 [shape = 's32[2]{0}', space=sflag, size = 0x8, scoped, tag = 'scoped memory for tpu_custom_call.1']
    #allocation4 [shape = 's32[2]{0}', space=sflag, size = 0x8, scoped, tag = 'scoped memory for tpu_custom_call.1']
    #allocation5 [shape = 'u8[131072]{0}', space=vmem, size = 0x20000, scoped, tag = 'input window, operand 1']
    #allocation6 [shape = 's32[2]{0}', space=sflag, size = 0x8, scoped, tag = 'scoped memory for tpu_custom_call.1']
    #allocation7 [shape = 'u8[131072]{0}', space=vmem, size = 0x20000, scoped, tag = 'input window, operand 2']
    #allocation8 [shape = 'u8[8192]{0}', space=vmem, size = 0x2000, scoped, tag = 'input window, operand 3']
    #allocation9 [shape = 's32[2]{0}', space=sflag, size = 0x8, scoped, tag = 'scoped memory for tpu_custom_call.1']
    #allocation10 [shape = 'u8[8192]{0}', space=vmem, size = 0x2000, scoped, tag = 'output window, operand 0']
    %9 = vsyncpa [#allocation3], 0
    %s10 = scalar_lea.sflag [#allocation3], 1
    %11 = vsyncpa %s10, 0
    %12 = vsyncpa [#allocation6], 0
    %s13 = scalar_lea.sflag [#allocation6], 1
    %14 = vsyncpa %s13, 0
    %15 = vsyncpa [#allocation9], 0
    %s16 = scalar_lea.sflag [#allocation9], 1
    %17 = vsyncpa %s16, 0
    %18 = vsyncpa [#allocation4], 0
    %s19 = scalar_lea.sflag [#allocation4], 1
    %20 = vsyncpa %s19, 0
    loop: start=0, step=1, limit=4
    $region2: #{tpu_custom_call.1} parent=1 // loop_pre_header
      _
    $region3: #{tpu_custom_call.1} parent=1 // loop_header
      %s22 = sphi 0, %s26
      %p23 = scmp.ge.s32.totalorder %s22, 4
      %s32 = sphi 0, %s34
      %s35 = sphi 0, %s32
      %s36 = sphi 0, %s35
      %s52 = sphi 0, %s36
      %s58 = sphi 0, %s60
      %s61 = sphi 0, %s58
      %s62 = sphi 0, %s61
      %s78 = sphi 0, %s62
      %s84 = sphi 0, %s86
      %s87 = sphi 0, %s84
      %s88 = sphi 0, %s87
      %s104 = sphi 0, %s88
      %s110 = sphi 0, %s112
      %s113 = sphi 0, %s110
      %s114 = sphi 0, %s113
      %s130 = sphi 0, %s114
      %s136 = sphi 0, %s138
      %s139 = sphi 0, %s136
      %s140 = sphi 0, %s139
      %s156 = sphi 0, %s140
    $region4: #{tpu_custom_call.1} parent=1 // loop_header_branch
      %25 = sbr.rel (%p23) target = $region8
    $region5: #{tpu_custom_call.1} parent=1 // loop_body
      %s27 = ssub.s32 %s22, 1
      %s28 = ssub.s32 %s22, 2
      %s29 = sadd.s32 %s22, 1
      %s30 = ssub.s32 %s22, %s29
      %p31 = scmp.eq.s32.totalorder %s30, 0
      %s33 = sadd.s32 %s32, 1
      %s34 = scalar_select %p31, %s32, %s33
      %p37 = pneg %p31
      %p38 = scmp.eq.s32.totalorder %s22, 1
      %p39 = por %p37, %p38
      %p40 = scmp.ne.s32.totalorder %s32, %s35
      %p41 = scmp.eq.s32.totalorder %s22, 0
      %p42 = por %p40, %p41
      %p43 = scmp.ne.s32.totalorder %s32, %s35
      %p44 = scmp.eq.s32.totalorder %s27, 1
      %p45 = por %p43, %p44
      %p46 = scmp.ne.s32.totalorder %s35, %s36
      %p47 = scmp.eq.s32.totalorder %s27, 0
      %p48 = por %p46, %p47
      %p49 = scmp.ne.s32.totalorder %s35, %s36
      %p50 = scmp.eq.s32.totalorder %s28, 1
      %p51 = por %p49, %p50
      %p53 = scmp.ne.s32.totalorder %s36, %s52
      %p54 = scmp.eq.s32.totalorder %s28, 0
      %p55 = por %p53, %p54
      %s56 = ssub.s32 %s22, %s29
      %p57 = scmp.eq.s32.totalorder %s56, 0
      %s59 = sadd.s32 %s58, 1
      %s60 = scalar_select %p57, %s58, %s59
      %p63 = pneg %p57
      %p64 = scmp.eq.s32.totalorder %s22, 1
      %p65 = por %p63, %p64
      %p66 = scmp.ne.s32.totalorder %s58, %s61
      %p67 = scmp.eq.s32.totalorder %s22, 0
      %p68 = por %p66, %p67
      %p69 = scmp.ne.s32.totalorder %s58, %s61
      %p70 = scmp.eq.s32.totalorder %s27, 1
      %p71 = por %p69, %p70
      %p72 = scmp.ne.s32.totalorder %s61, %s62
      %p73 = scmp.eq.s32.totalorder %s27, 0
      %p74 = por %p72, %p73
      %p75 = scmp.ne.s32.totalorder %s61, %s62
      %p76 = scmp.eq.s32.totalorder %s28, 1
      %p77 = por %p75, %p76
      %p79 = scmp.ne.s32.totalorder %s62, %s78
      %p80 = scmp.eq.s32.totalorder %s28, 0
      %p81 = por %p79, %p80
      %s82 = ssub.s32 %s22, %s29
      %p83 = scmp.eq.s32.totalorder %s82, 0
      %s85 = sadd.s32 %s84, 1
      %s86 = scalar_select %p83, %s84, %s85
      %p89 = pneg %p83
      %p90 = scmp.eq.s32.totalorder %s22, 1
      %p91 = por %p89, %p90
      %p92 = scmp.ne.s32.totalorder %s84, %s87
      %p93 = scmp.eq.s32.totalorder %s22, 0
      %p94 = por %p92, %p93
      %p95 = scmp.ne.s32.totalorder %s84, %s87
      %p96 = scmp.eq.s32.totalorder %s27, 1
      %p97 = por %p95, %p96
      %p98 = scmp.ne.s32.totalorder %s87, %s88
      %p99 = scmp.eq.s32.totalorder %s27, 0
      %p100 = por %p98, %p99
      %p101 = scmp.ne.s32.totalorder %s87, %s88
      %p102 = scmp.eq.s32.totalorder %s28, 1
      %p103 = por %p101, %p102
      %p105 = scmp.ne.s32.totalorder %s88, %s104
      %p106 = scmp.eq.s32.totalorder %s28, 0
      %p107 = por %p105, %p106
      %s108 = ssub.s32 %s22, %s29
      %p109 = scmp.eq.s32.totalorder %s108, 0
      %s111 = sadd.s32 %s110, 1
      %s112 = scalar_select %p109, %s110, %s111
      %p115 = pneg %p109
      %p116 = scmp.eq.s32.totalorder %s22, 1
      %p117 = por %p115, %p116
      %p118 = scmp.ne.s32.totalorder %s110, %s113
      %p119 = scmp.eq.s32.totalorder %s22, 0
      %p120 = por %p118, %p119
      %p121 = scmp.ne.s32.totalorder %s110, %s113
      %p122 = scmp.eq.s32.totalorder %s27, 1
      %p123 = por %p121, %p122
      %p124 = scmp.ne.s32.totalorder %s113, %s114
      %p125 = scmp.eq.s32.totalorder %s27, 0
      %p126 = por %p124, %p125
      %p127 = scmp.ne.s32.totalorder %s113, %s114
      %p128 = scmp.eq.s32.totalorder %s28, 1
      %p129 = por %p127, %p128
      %p131 = scmp.ne.s32.totalorder %s114, %s130
      %p132 = scmp.eq.s32.totalorder %s28, 0
      %p133 = por %p131, %p132
      %s134 = ssub.s32 %s22, %s29
      %p135 = scmp.eq.s32.totalorder %s134, 0
      %s137 = sadd.s32 %s136, 1
      %s138 = scalar_select %p135, %s136, %s137
      %p141 = pneg %p135
      %p142 = scmp.eq.s32.totalorder %s22, 1
      %p143 = por %p141, %p142
      %p144 = scmp.ne.s32.totalorder %s136, %s139
      %p145 = scmp.eq.s32.totalorder %s22, 0
      %p146 = por %p144, %p145
      %p147 = scmp.ne.s32.totalorder %s136, %s139
      %p148 = scmp.eq.s32.totalorder %s27, 1
      %p149 = por %p147, %p148
      %p150 = scmp.ne.s32.totalorder %s139, %s140
      %p151 = scmp.eq.s32.totalorder %s27, 0
      %p152 = por %p150, %p151
      %p153 = scmp.ne.s32.totalorder %s139, %s140
      %p154 = scmp.eq.s32.totalorder %s28, 1
      %p155 = por %p153, %p154
      %p157 = scmp.ne.s32.totalorder %s140, %s156
      %p158 = scmp.eq.s32.totalorder %s28, 0
      %p159 = por %p157, %p158
      %p160 = scmp.le.s32.totalorder 1, %s22
      %p161 = scmp.lt.s32.totalorder %s22, 3
      %p162 = pnand %p160, %p161
      %p163 = pneg %p162
      // Predicated region
      $region9: #{tpu_custom_call.1} parent=5 // pred_check
        _
      $region10: #{tpu_custom_call.1} parent=5 // pred_check_branch
        %165 = sbr.rel (%p162) target = $region12
      $region11: #{tpu_custom_call.1} parent=5 // pred_region
        %s166 = ssub.s32 %s22, 1
      $region12: #{tpu_custom_call.1} parent=5 // pred_fallthru
        _
      %p167 = scmp.lt.s32.totalorder %s22, 2
      // Predicated region
      $region13: #{tpu_custom_call.1} parent=5 // pred_check
        %p168 = pneg %p167
      $region14: #{tpu_custom_call.1} parent=5 // pred_check_branch
        %170 = sbr.rel (%p168) target = $region16
      $region15: #{tpu_custom_call.1} parent=5 // pred_region
        // Predicated region
        $region17: #{tpu_custom_call.1} parent=15 // pred_check
          %p171 = pneg %p42
        $region18: #{tpu_custom_call.1} parent=15 // pred_check_branch
          %173 = sbr.rel (%p171) target = $region20
        $region19: #{tpu_custom_call.1} parent=15 // pred_region
          %s174 = sand.u32 %s32, 1
          %s175 = scalar_lea.sflag [#allocation3], %s174
          %s176 = sand.u32 %s32, 1
          %s177 = smul.addr %s176, 8
          %s178 = scalar_lea.vmem [#allocation2], %s177
          %s180 = ssub.s32 128, 128
          %181 = vsyncadd %s175, %s180
          %s182 = smul.addr %s22, 128
          %s183 = scalar_lea.hbm %s0, %s182
          %s185 = sshll.u32 %s178, 4
          %s186 = int_to_ptr.vmem [resolvable:$true] %s185
          %188 = dma.hbm_to_vmem [thread:$0]  %s183, 128, %s186, %s175
        $region20: #{tpu_custom_call.1} parent=15 // pred_fallthru
          _
        // Predicated region
        $region21: #{tpu_custom_call.1} parent=15 // pred_check
          %p189 = pneg %p68
        $region22: #{tpu_custom_call.1} parent=15 // pred_check_branch
          %191 = sbr.rel (%p189) target = $region24
        $region23: #{tpu_custom_call.1} parent=15 // pred_region
          %s192 = sand.u32 %s22, 1
          %s193 = scalar_lea.sflag [#allocation6], %s192
          %s194 = sand.u32 %s58, 1
          %s195 = smul.addr %s194, 128
          %s196 = scalar_lea.vmem [#allocation5], %s195
          %s198 = ssub.s32 2048, 2048
          %199 = vsyncadd %s193, %s198
          %s200 = smul.addr %s22, 16
          %s201 = smul.addr %s200, 128
          %s202 = scalar_lea.hbm %s1, %s201
          %s203 = sshll.u32 %s196, 4
          %s204 = int_to_ptr.vmem [resolvable:$true] %s203
          %209 = dma.hbm_to_vmem [thread:$0]  %s202, 2048, %s204, %s193, 128, 128, 8
        $region24: #{tpu_custom_call.1} parent=15 // pred_fallthru
          _
        // Predicated region
        $region25: #{tpu_custom_call.1} parent=15 // pred_check
          %p210 = pneg %p94
        $region26: #{tpu_custom_call.1} parent=15 // pred_check_branch
          %212 = sbr.rel (%p210) target = $region28
        $region27: #{tpu_custom_call.1} parent=15 // pred_region
          %s213 = sand.u32 %s22, 1
          %s214 = scalar_lea.sflag [#allocation6], %s213
          %s215 = sand.u32 %s84, 1
          %s216 = smul.addr %s215, 128
          %s217 = scalar_lea.vmem [#allocation7], %s216
          %s219 = ssub.s32 2048, 2048
          %220 = vsyncadd %s214, %s219
          %s221 = smul.addr %s22, 16
          %s222 = smul.addr %s221, 128
          %s223 = scalar_lea.hbm %s2, %s222
          %s224 = sshll.u32 %s217, 4
          %s225 = int_to_ptr.vmem [resolvable:$true] %s224
          %230 = dma.hbm_to_vmem [thread:$0]  %s223, 2048, %s225, %s214, 128, 128, 8
        $region28: #{tpu_custom_call.1} parent=15 // pred_fallthru
          _
        // Predicated region
        $region29: #{tpu_custom_call.1} parent=15 // pred_check
          %p231 = pneg %p120
        $region30: #{tpu_custom_call.1} parent=15 // pred_check_branch
          %233 = sbr.rel (%p231) target = $region32
        $region31: #{tpu_custom_call.1} parent=15 // pred_region
          %s234 = sand.u32 %s110, 1
          %s235 = scalar_lea.sflag [#allocation9], %s234
          %s236 = sand.u32 %s110, 1
          %s237 = smul.addr %s236, 8
          %s238 = scalar_lea.vmem [#allocation8], %s237
          %s240 = ssub.s32 128, 128
          %241 = vsyncadd %s235, %s240
          %s242 = smul.addr %s22, 128
          %s243 = scalar_lea.hbm %s3, %s242
          %s245 = sshll.u32 %s238, 4
          %s246 = int_to_ptr.vmem [resolvable:$true] %s245
          %248 = dma.hbm_to_vmem [thread:$0]  %s243, 128, %s246, %s235
        $region32: #{tpu_custom_call.1} parent=15 // pred_fallthru
          _
      $region16: #{tpu_custom_call.1} parent=5 // pred_fallthru
        _
      %p249 = scmp.le.s32.totalorder 1, %s22
      %p250 = scmp.lt.s32.totalorder %s22, 3
      %p251 = pnand %p249, %p250
      %p252 = pneg %p251
      // Predicated region
      $region33: #{tpu_custom_call.1} parent=5 // pred_check
        _
      $region34: #{tpu_custom_call.1} parent=5 // pred_check_branch
        %254 = sbr.rel (%p251) target = $region36
      $region35: #{tpu_custom_call.1} parent=5 // pred_region
        %s255 = ssub.s32 %s22, 1
        %s256 = sand.u32 %s35, 1
        %s257 = scalar_lea.sflag [#allocation3], %s256
        %s258 = sand.u32 %s35, 1
        %s259 = smul.addr %s258, 8
        %s260 = scalar_lea.vmem [#allocation2], %s259
        // Predicated region
        $region37: #{tpu_custom_call.1} parent=35 // pred_check
          %p261 = pneg %p48
        $region38: #{tpu_custom_call.1} parent=35 // pred_check_branch
          %263 = sbr.rel (%p261) target = $region40
        $region39: #{tpu_custom_call.1} parent=35 // pred_region
          %264 = dma.done %s257, 128
        $region40: #{tpu_custom_call.1} parent=35 // pred_fallthru
          _
        %s265 = sand.u32 %s27, 1
        %s266 = scalar_lea.sflag [#allocation6], %s265
        %s267 = sand.u32 %s61, 1
        %s268 = smul.addr %s267, 128
        %s269 = scalar_lea.vmem [#allocation5], %s268
        // Predicated region
        $region41: #{tpu_custom_call.1} parent=35 // pred_check
          %p270 = pneg %p74
        $region42: #{tpu_custom_call.1} parent=35 // pred_check_branch
          %272 = sbr.rel (%p270) target = $region44
        $region43: #{tpu_custom_call.1} parent=35 // pred_region
          %273 = dma.done %s266, 2048
        $region44: #{tpu_custom_call.1} parent=35 // pred_fallthru
          _
        %s274 = sand.u32 %s27, 1
        %s275 = scalar_lea.sflag [#allocation6], %s274
        %s276 = sand.u32 %s87, 1
        %s277 = smul.addr %s276, 128
        %s278 = scalar_lea.vmem [#allocation7], %s277
        // Predicated region
        $region45: #{tpu_custom_call.1} parent=35 // pred_check
          %p279 = pneg %p100
        $region46: #{tpu_custom_call.1} parent=35 // pred_check_branch
          %281 = sbr.rel (%p279) target = $region48
        $region47: #{tpu_custom_call.1} parent=35 // pred_region
          %282 = dma.done %s275, 2048
        $region48: #{tpu_custom_call.1} parent=35 // pred_fallthru
          _
        %s283 = sand.u32 %s113, 1
        %s284 = scalar_lea.sflag [#allocation9], %s283
        %s285 = sand.u32 %s113, 1
        %s286 = smul.addr %s285, 8
        %s287 = scalar_lea.vmem [#allocation8], %s286
        // Predicated region
        $region49: #{tpu_custom_call.1} parent=35 // pred_check
          %p288 = pneg %p126
        $region50: #{tpu_custom_call.1} parent=35 // pred_check_branch
          %290 = sbr.rel (%p288) target = $region52
        $region51: #{tpu_custom_call.1} parent=35 // pred_region
          %291 = dma.done %s284, 128
        $region52: #{tpu_custom_call.1} parent=35 // pred_fallthru
          _
        %s292 = sand.u32 %s35, 1
        %s293 = scalar_lea.sflag [#allocation3], %s292
        %s294 = sand.u32 %s35, 1
        %s295 = smul.addr %s294, 8
        %s296 = scalar_lea.vmem [#allocation2], %s295
        %p297 = pneg %p48
        %p298 = pneg %p45
        %s299 = sand.u32 %s27, 1
        %s300 = scalar_lea.sflag [#allocation6], %s299
        %s301 = sand.u32 %s61, 1
        %s302 = smul.addr %s301, 128
        %s303 = scalar_lea.vmem [#allocation5], %s302
        %p304 = pneg %p74
        %p305 = pneg %p71
        %s306 = sand.u32 %s27, 1
        %s307 = scalar_lea.sflag [#allocation6], %s306
        %s308 = sand.u32 %s87, 1
        %s309 = smul.addr %s308, 128
        %s310 = scalar_lea.vmem [#allocation7], %s309
        %p311 = pneg %p100
        %p312 = pneg %p97
        %s313 = sand.u32 %s113, 1
        %s314 = scalar_lea.sflag [#allocation9], %s313
        %s315 = sand.u32 %s113, 1
        %s316 = smul.addr %s315, 8
        %s317 = scalar_lea.vmem [#allocation8], %s316
        %p318 = pneg %p126
        %p319 = pneg %p123
        %p320 = pneg %p152
        %p321 = pneg %p149
        %s322 = sand.u32 %s139, 1
        %s323 = scalar_lea.sflag [#allocation4], %s322
        %s324 = sand.u32 %s139, 1
        %s325 = smul.addr %s324, 8
        %s326 = scalar_lea.vmem [#allocation10], %s325
        %v327 = vld [vmem:[%s260] sm:$0xff]
        %v328 = vmul.f32 %v327, 10.0
        %v329 = vld [vmem:[%s269] sm:$0xff]
        %v330 = vld [vmem:[%s269 + $0x8] sm:$0xff]
        %v331 = vld [vmem:[%s269 + $0x10] sm:$0xff]
        %v332 = vld [vmem:[%s269 + $0x18] sm:$0xff]
        %v333 = vld [vmem:[%s269 + $0x20] sm:$0xff]
        %v334 = vld [vmem:[%s269 + $0x28] sm:$0xff]
        %v335 = vld [vmem:[%s269 + $0x30] sm:$0xff]
        %v336 = vld [vmem:[%s269 + $0x38] sm:$0xff]
        %v337 = vld [vmem:[%s269 + $0x40] sm:$0xff]
        %v338 = vld [vmem:[%s269 + $0x48] sm:$0xff]
        %v339 = vld [vmem:[%s269 + $0x50] sm:$0xff]
        %v340 = vld [vmem:[%s269 + $0x58] sm:$0xff]
        %v341 = vld [vmem:[%s269 + $0x60] sm:$0xff]
        %v342 = vld [vmem:[%s269 + $0x68] sm:$0xff]
        %v343 = vld [vmem:[%s269 + $0x70] sm:$0xff]
        %v344 = vld [vmem:[%s269 + $0x78] sm:$0xff]
        %v345 = vld [vmem:[%s278] sm:$0xff]
        %v346 = vld [vmem:[%s278 + $0x8] sm:$0xff]
        %v347 = vld [vmem:[%s278 + $0x10] sm:$0xff]
        %v348 = vld [vmem:[%s278 + $0x18] sm:$0xff]
        %v349 = vld [vmem:[%s278 + $0x20] sm:$0xff]
        %v350 = vld [vmem:[%s278 + $0x28] sm:$0xff]
        %v351 = vld [vmem:[%s278 + $0x30] sm:$0xff]
        %v352 = vld [vmem:[%s278 + $0x38] sm:$0xff]
        %v353 = vld [vmem:[%s278 + $0x40] sm:$0xff]
        %v354 = vld [vmem:[%s278 + $0x48] sm:$0xff]
        %v355 = vld [vmem:[%s278 + $0x50] sm:$0xff]
        %v356 = vld [vmem:[%s278 + $0x58] sm:$0xff]
        %v357 = vld [vmem:[%s278 + $0x60] sm:$0xff]
        %v358 = vld [vmem:[%s278 + $0x68] sm:$0xff]
        %v359 = vld [vmem:[%s278 + $0x70] sm:$0xff]
        %v360 = vld [vmem:[%s278 + $0x78] sm:$0xff]
        %361 = vmatprep.subr.mxu0 0.0
        %362 = vmatpush1.xpose.msra.mxu0 %v344
        %363 = vmatprep.subr.mxu0 0.0
        %364 = vmatpush1.xpose.msra.mxu0 %v343
        %365 = vmatprep.subr.mxu0 0.0
        %366 = vmatpush1.xpose.msra.mxu0 %v342
        %367 = vmatprep.subr.mxu0 0.0
        %368 = vmatpush1.xpose.msra.mxu0 %v341
        %369 = vmatprep.subr.mxu0 0.0
        %370 = vmatpush1.xpose.msra.mxu0 %v340
        %371 = vmatprep.subr.mxu0 0.0
        %372 = vmatpush1.xpose.msra.mxu0 %v339
        %373 = vmatprep.subr.mxu0 0.0
        %374 = vmatpush1.xpose.msra.mxu0 %v338
        %375 = vmatprep.subr.mxu0 0.0
        %376 = vmatpush1.xpose.msra.mxu0 %v337
        %377 = vmatprep.subr.mxu0 0.0
        %378 = vmatpush1.xpose.msra.mxu0 %v336
        %379 = vmatprep.subr.mxu0 0.0
        %380 = vmatpush1.xpose.msra.mxu0 %v335
        %381 = vmatprep.subr.mxu0 0.0
        %382 = vmatpush1.xpose.msra.mxu0 %v334
        %383 = vmatprep.subr.mxu0 0.0
        %384 = vmatpush1.xpose.msra.mxu0 %v333
        %385 = vmatprep.subr.mxu0 0.0
        %386 = vmatpush1.xpose.msra.mxu0 %v332
        %387 = vmatprep.subr.mxu0 0.0
        %388 = vmatpush1.xpose.msra.mxu0 %v331
        %389 = vmatprep.subr.mxu0 0.0
        %390 = vmatpush1.xpose.msra.mxu0 %v330
        %391 = vmatprep.subr.mxu0 0.0
        %392 = vmatpush1.xpose.msra.mxu0 %v329
        %393 = vmatprep.subr.mxu0 0.0
        %394 = vmatpush2.xpose.msra.mxu0 0.0
        %395 = vmatprep.subr.mxu0 0.0
        %396 = vmatpush2.xpose.msra.mxu0 0.0
        %397 = vmatprep.subr.mxu0 0.0
        %398 = vmatpush2.xpose.msra.mxu0 0.0
        %399 = vmatprep.subr.mxu0 0.0
        %400 = vmatpush2.xpose.msra.mxu0 0.0
        %401 = vmatprep.subr.mxu0 0.0
        %402 = vmatpush2.xpose.msra.mxu0 0.0
        %403 = vmatprep.subr.mxu0 0.0
        %404 = vmatpush2.xpose.msra.mxu0 0.0
        %405 = vmatprep.subr.mxu0 0.0
        %406 = vmatpush2.xpose.msra.mxu0 0.0
        %407 = vmatprep.subr.mxu0 0.0
        %408 = vmatpush2.xpose.msra.mxu0 0.0
        %409 = vmatprep.subr.mxu0 0.0
        %410 = vmatpush2.xpose.msra.mxu0 0.0
        %411 = vmatprep.subr.mxu0 0.0
        %412 = vmatpush2.xpose.msra.mxu0 0.0
        %413 = vmatprep.subr.mxu0 0.0
        %414 = vmatpush2.xpose.msra.mxu0 0.0
        %415 = vmatprep.subr.mxu0 0.0
        %416 = vmatpush2.xpose.msra.mxu0 0.0
        %417 = vmatprep.subr.mxu0 0.0
        %418 = vmatpush2.xpose.msra.mxu0 0.0
        %419 = vmatprep.subr.mxu0 0.0
        %420 = vmatpush2.xpose.msra.mxu0 0.0
        %421 = vmatprep.subr.mxu0 0.0
        %422 = vmatpush2.xpose.msra.mxu0 0.0
        %423 = vmatprep.subr.mxu0 0.0
        %424 = vmatpush2.xpose.msra.mxu0 0.0
        %425 = vmatprep.mubr.f32.mxu0 0.0
        %426 = vmatmul.mubr.f32.gmra.mxu0 %v328
        %v427 = vpop.f32.mrf.mxu0
        %v428 = vadd.f32 0.0, %v427
        %v429 = vpop.f32.mrf.mxu0
        %430 = vdwg.mxu0
        %431 = vmax.xlane.f32.xlu0 %v428
        %v432 = vpop.xlane.xlu0 %431
        %v433 = vsub.f32 %v428, %v432
        %v434 = vmul.f32 %v433, 1.442695
        %v435 = vpow.pop %v434
        %436 = vadd.xlane.f32.xlu0 %v435
        %v437 = vpop.xlane.xlu0 %436
        %v438 = vmul.f32 %v437, 0.9
        %v439 = vrcp.pop %v438
        %v440 = vmul.f32 %v435, %v439
        %v441 = vld [vmem:[%s287] sm:$0xff]
        %vm442 = vcmp.ge.f32.partialorder %v441, 0.1
        %v443 = vsel %vm442, %v440, 0.0
        %444 = vmatprep.subr.mxu0 0.0
        %445 = vmatpush1.msra.mxu0 %v360
        %446 = vmatprep.subr.mxu0 0.0
        %447 = vmatpush1.msra.mxu0 %v359
        %448 = vmatprep.subr.mxu0 0.0
        %449 = vmatpush1.msra.mxu0 %v358
        %450 = vmatprep.subr.mxu0 0.0
        %451 = vmatpush1.msra.mxu0 %v357
        %452 = vmatprep.subr.mxu0 0.0
        %453 = vmatpush1.msra.mxu0 %v356
        %454 = vmatprep.subr.mxu0 0.0
        %455 = vmatpush1.msra.mxu0 %v355
        %456 = vmatprep.subr.mxu0 0.0
        %457 = vmatpush1.msra.mxu0 %v354
        %458 = vmatprep.subr.mxu0 0.0
        %459 = vmatpush1.msra.mxu0 %v353
        %460 = vmatprep.subr.mxu0 0.0
        %461 = vmatpush1.msra.mxu0 %v352
        %462 = vmatprep.subr.mxu0 0.0
        %463 = vmatpush1.msra.mxu0 %v351
        %464 = vmatprep.subr.mxu0 0.0
        %465 = vmatpush1.msra.mxu0 %v350
        %466 = vmatprep.subr.mxu0 0.0
        %467 = vmatpush1.msra.mxu0 %v349
        %468 = vmatprep.subr.mxu0 0.0
        %469 = vmatpush1.msra.mxu0 %v348
        %470 = vmatprep.subr.mxu0 0.0
        %471 = vmatpush1.msra.mxu0 %v347
        %472 = vmatprep.subr.mxu0 0.0
        %473 = vmatpush1.msra.mxu0 %v346
        %474 = vmatprep.subr.mxu0 0.0
        %475 = vmatpush1.msra.mxu0 %v345
        %476 = vmatprep.subr.mxu0 0.0
        %477 = vmatpush2.msra.mxu0 0.0
        %478 = vmatprep.subr.mxu0 0.0
        %479 = vmatpush2.msra.mxu0 0.0
        %480 = vmatprep.subr.mxu0 0.0
        %481 = vmatpush2.msra.mxu0 0.0
        %482 = vmatprep.subr.mxu0 0.0
        %483 = vmatpush2.msra.mxu0 0.0
        %484 = vmatprep.subr.mxu0 0.0
        %485 = vmatpush2.msra.mxu0 0.0
        %486 = vmatprep.subr.mxu0 0.0
        %487 = vmatpush2.msra.mxu0 0.0
        %488 = vmatprep.subr.mxu0 0.0
        %489 = vmatpush2.msra.mxu0 0.0
        %490 = vmatprep.subr.mxu0 0.0
        %491 = vmatpush2.msra.mxu0 0.0
        %492 = vmatprep.subr.mxu0 0.0
        %493 = vmatpush2.msra.mxu0 0.0
        %494 = vmatprep.subr.mxu0 0.0
        %495 = vmatpush2.msra.mxu0 0.0
        %496 = vmatprep.subr.mxu0 0.0
        %497 = vmatpush2.msra.mxu0 0.0
        %498 = vmatprep.subr.mxu0 0.0
        %499 = vmatpush2.msra.mxu0 0.0
        %500 = vmatprep.subr.mxu0 0.0
        %501 = vmatpush2.msra.mxu0 0.0
        %502 = vmatprep.subr.mxu0 0.0
        %503 = vmatpush2.msra.mxu0 0.0
        %504 = vmatprep.subr.mxu0 0.0
        %505 = vmatpush2.msra.mxu0 0.0
        %506 = vmatprep.subr.mxu0 0.0
        %507 = vmatpush2.msra.mxu0 0.0
        %508 = vmatprep.mubr.f32.mxu0 0.0
        %509 = vmatmul.mubr.f32.gmra.mxu0 %v443
        %v510 = vpop.f32.mrf.mxu0
        %v511 = vadd.f32 0.0, %v510
        %v512 = vpop.f32.mrf.mxu0
        %513 = vdwg.mxu0
        %514 = vst [vmem:[%s326] sm:$0xff] %v511
        %s515 = sand.u32 %s139, 1
        %s516 = scalar_lea.sflag [#allocation4], %s515
        %s517 = sand.u32 %s139, 1
        %s518 = smul.addr %s517, 8
        %s519 = scalar_lea.vmem [#allocation10], %s518
        // Predicated region
        $region53: #{tpu_custom_call.1} parent=35 // pred_check
          %p520 = pneg %p149
        $region54: #{tpu_custom_call.1} parent=35 // pred_check_branch
          %522 = sbr.rel (%p520) target = $region56
        $region55: #{tpu_custom_call.1} parent=35 // pred_region
          %s524 = ssub.s32 128, 128
          %525 = vsyncadd %s516, %s524
          %s526 = smul.addr %s27, 128
          %s527 = scalar_lea.hbm %s4, %s526
          %s529 = sshll.u32 %s519, 4
          %s530 = int_to_ptr.vmem [resolvable:$true] %s529
          %532 = dma.vmem_to_hbm [thread:$0]  %s530, 128, %s527, %s516
        $region56: #{tpu_custom_call.1} parent=35 // pred_fallthru
          _
      $region36: #{tpu_custom_call.1} parent=5 // pred_fallthru
        _
      %p533 = scmp.le.s32.totalorder 2, %s22
      // Predicated region
      $region57: #{tpu_custom_call.1} parent=5 // pred_check
        %p534 = pneg %p533
      $region58: #{tpu_custom_call.1} parent=5 // pred_check_branch
        %536 = sbr.rel (%p534) target = $region60
      $region59: #{tpu_custom_call.1} parent=5 // pred_region
        %s537 = ssub.s32 %s22, 2
        // Predicated region
        $region61: #{tpu_custom_call.1} parent=59 // pred_check
          %p538 = pneg %p155
        $region62: #{tpu_custom_call.1} parent=59 // pred_check_branch
          %540 = sbr.rel (%p538) target = $region64
        $region63: #{tpu_custom_call.1} parent=59 // pred_region
          %s541 = sand.u32 %s140, 1
          %s542 = scalar_lea.sflag [#allocation4], %s541
          %s543 = sand.u32 %s140, 1
          %s544 = smul.addr %s543, 8
          %s545 = scalar_lea.vmem [#allocation10], %s544
          %546 = dma.done %s542, 128
        $region64: #{tpu_custom_call.1} parent=59 // pred_fallthru
          _
      $region60: #{tpu_custom_call.1} parent=5 // pred_fallthru
        _
    $region6: #{tpu_custom_call.1} parent=1 // loop_footer
      %s26 = sadd.s32 1, %s22
    $region7: #{tpu_custom_call.1} parent=1 // loop_footer_branch
      %21 = sbr.rel target = $region3
    $region8: #{tpu_custom_call.1} parent=1 // loop_exit
      _
    %547 = vsyncpa [#allocation3], 1
    %s548 = scalar_lea.sflag [#allocation3], 1
    %549 = vsyncpa %s548, 1
    %550 = vsyncpa [#allocation6], 1
    %s551 = scalar_lea.sflag [#allocation6], 1
    %552 = vsyncpa %s551, 1
    %553 = vsyncpa [#allocation9], 1
    %s554 = scalar_lea.sflag [#allocation9], 1
    %555 = vsyncpa %s554, 1
    %556 = vsyncpa [#allocation4], 1
    %s557 = scalar_lea.sflag [#allocation4], 1
    %558 = vsyncpa %s557, 1

</llo_original>
